<compile_context>
chip_gen: v6e
topology: v6e:2x2x1
jax: 0.10.0
libtpu: 0.0.40
codegen_flags: <defaults>
</compile_context>

<pallas_src>
import jax
import jax.numpy as jnp
from jax.experimental import pallas as pl
from jax.experimental.pallas import tpu as pltpu


def _round_up(v, m):
    return (v + m - 1) // m * m


def _cdiv(a, b):
    return -(-a // b)


def _last_spiking_kernel(x_ref, w_ref, b_ref, o_ref):
    # x_ref: (n_tile, Kp)   lane-dense flattened (T*D, zero-padded) batch tile
    # w_ref: (Kp, Cp)       time-replicated, lane-padded weight (resident)
    # b_ref: (1, Cp)        f32 bias, pre-scaled by T (resident)
    # o_ref: (n_tile, Cp)   lane-dense output tile
    y = jnp.dot(x_ref[...], w_ref[...], preferred_element_type=jnp.float32)
    o_ref[...] = (y + b_ref[...]).astype(o_ref.dtype)


def last_spiking_forward(x, weight, bias, *, idem=False, n_tile=None):
    """x: [N, T, D]; weight: [C, D] (PyTorch Linear layout); bias: [C]."""
    if idem:
        # Mirrors the PyTorch module: idem=True passes x through unchanged.
        return x

    N, T, D = x.shape
    C = weight.shape[0]
    itemsize = jnp.dtype(x.dtype).itemsize
    out_itemsize = itemsize

    # Lane-pad the contraction (K = T*D) and class (C) dims to 128 multiples.
    K = T * D
    Kp = max(128, _round_up(K, 128))
    Cp = max(128, _round_up(C, 128))

    # Time-replicated weight: (T*D, C) -> pad -> (Kp, Cp); native dtype of x
    # so the MXU runs its fast path (bf16 if x is bf16). K accumulation is f32.
    w_rep = jnp.tile(weight.T, (T, 1)).astype(x.dtype)                 # [T*D, C]
    w = jnp.zeros((Kp, Cp), x.dtype).at[:K, :C].set(w_rep)             # [Kp, Cp]
    # Bias applied once per output row, pre-scaled by T, kept in f32.
    b = jnp.zeros((1, Cp), jnp.float32).at[0, :C].set(
        jnp.float32(T) * bias.astype(jnp.float32))                     # [1, Cp]

    # Physical VMEM capacity (v5e/v6e: 128 MiB, v7x: 64 MiB per TC).
    try:
        vmem_cap = int(pltpu.get_tpu_info().vmem_capacity_bytes)
    except Exception:  # pragma: no cover - conservative fallback
        vmem_cap = 64 * 1024 * 1024

    # Batch tile: ~vmem_cap/6 bytes per x tile (~10 MiB on v7x, ~21 MiB on
    # v5e/v6e), >= 8 sublanes, 128-row multiples when possible, and at least
    # 2 grid steps when N allows so the "parallel" axis can split across TCs.
    per_row = Kp * itemsize
    if n_tile is None:
        rows = max(8, (vmem_cap // 6) // max(1, per_row))
        rows = min(rows, max(8, _round_up(_cdiv(N, 2), 8)))  # >= 2 grid steps if N > 8
        rows = (rows // 128) * 128 if rows >= 128 else _round_up(rows, 8)
        n_tile = max(8, rows)
    else:
        n_tile = max(8, _round_up(int(n_tile), 8))
    n_tile = min(n_tile, _round_up(max(N, 1), 8))

    Np = _round_up(N, n_tile)

    # Lane-dense, contiguous x stream: [N, T*D], zero-padded to [Np, Kp].
    x2 = x.reshape(N, K)
    if Np != N or Kp != K:
        x2 = jnp.pad(x2, ((0, Np - N), (0, Kp - K)))

    # VMEM limit from the actual padded, double-buffered footprint (+headroom),
    # capped with margin below physical VMEM (compiler internal scratch).
    x_tile_bytes = n_tile * Kp * itemsize
    w_bytes = Kp * Cp * jnp.dtype(w.dtype).itemsize
    b_bytes = 8 * Cp * 4  # one padded sublane group of f32
    out_tile_bytes = n_tile * Cp * out_itemsize
    vmem_need = 2 * (x_tile_bytes + w_bytes + b_bytes + out_tile_bytes)
    vmem_limit = int(min(vmem_cap * 7 // 8, max(vmem_need + (8 << 20), 32 << 20)))

    out = pl.pallas_call(
        _last_spiking_kernel,
        out_shape=jax.ShapeDtypeStruct((Np, Cp), x.dtype),
        grid_spec=pltpu.PrefetchScalarGridSpec(
            num_scalar_prefetch=0,
            grid=(Np // n_tile,),
            in_specs=[
                pl.BlockSpec((n_tile, Kp), lambda n: (n, 0)),  # x tile (lane-dense)
                pl.BlockSpec((Kp, Cp), lambda n: (0, 0)),      # weight (resident)
                pl.BlockSpec((1, Cp), lambda n: (0, 0)),       # bias (resident)
            ],
            out_specs=pl.BlockSpec((n_tile, Cp), lambda n: (n, 0)),
        ),
        compiler_params=pltpu.CompilerParams(
            dimension_semantics=("parallel",),  # batch axis -> shards across TCs
            vmem_limit_bytes=vmem_limit,
        ),
    )(x2, w, b)

    return out[:N, :C]


if __name__ == "__main__":
    # Small shapes consistent with the module: batch N, time steps T, feature D, classes C.
    N, T, D, C = 2, 8, 32, 10

    key = jax.random.PRNGKey(0)
    kx, kw, kb = jax.random.split(key, 3)

    x = jax.random.normal(kx, (N, T, D), dtype=jnp.float32)
    # Deterministic synthetic Linear params (shapes as in nn.Linear(D, C)).
    weight = jax.random.normal(kw, (C, D), dtype=jnp.float32) * 0.05
    bias = jax.random.normal(kb, (C,), dtype=jnp.float32) * 0.05

    out = last_spiking_forward(x, weight, bias)
    out = jax.block_until_ready(out)

    # Pure-JAX reference with identical (PyTorch) semantics:
    # flatten(0,1) -> Linear -> reshape -> sum over time.
    ref = (x.reshape(N * T, D) @ weight.T + bias).reshape(N, T, C).sum(axis=1)
    assert out.shape == (N, C)
    assert jnp.allclose(out, ref, atol=1e-3, rtol=1e-3), "mismatch vs reference"

    print("KERNEL_OK")
</pallas_src>

<mosaic_0001>
module attributes {stable_mosaic.version = 11 : i64} {
  func.func @_last_spiking_kernel(%arg0: i32, %arg1: memref<8x256xf32, #tpu.memory_space<vmem>>, %arg2: memref<256x128xf32, #tpu.memory_space<vmem>>, %arg3: memref<1x128xf32, #tpu.memory_space<vmem>>, %arg4: memref<8x128xf32, #tpu.memory_space<vmem>>) attributes {dimension_semantics = [#tpu.dimension_semantics<parallel>], iteration_bounds = array<i64: 1>, scalar_prefetch = 0 : i64, scratch_operands = 0 : i64, tpu.core_type = #tpu.core_type<tc>, window_params = [{transform_indices = @transform_0, window_bounds = array<i64: 8, 256>}, {pipeline_mode = #tpu.pipeline_mode<synchronous>, transform_indices = @transform_1, window_bounds = array<i64: 256, 128>}, {pipeline_mode = #tpu.pipeline_mode<synchronous>, transform_indices = @transform_2, window_bounds = array<i64: 1, 128>}, {transform_indices = @transform_3, window_bounds = array<i64: 8, 128>}]} {
    %c0 = arith.constant 0 : index
    %c0_0 = arith.constant 0 : index
    %0 = vector.load %arg1[%c0, %c0_0] : memref<8x256xf32, #tpu.memory_space<vmem>>, vector<8x256xf32>
    %c0_1 = arith.constant 0 : index
    %c0_2 = arith.constant 0 : index
    %1 = vector.load %arg2[%c0_1, %c0_2] : memref<256x128xf32, #tpu.memory_space<vmem>>, vector<256x128xf32>
    %cst = arith.constant dense<0.000000e+00> : vector<8x128xf32>
    %2 = tpu.matmul %0, %1, %cst {dimension_numbers = #tpu.dot_dimension_numbers<[1], [0], [0], [1], [0, 0, 1, 1], [], []>} : vector<8x256xf32>, vector<256x128xf32>, vector<8x128xf32> -> vector<8x128xf32>
    %c0_3 = arith.constant 0 : index
    %c0_4 = arith.constant 0 : index
    %3 = vector.load %arg3[%c0_3, %c0_4] : memref<1x128xf32, #tpu.memory_space<vmem>>, vector<1x128xf32>
    %4 = vector.broadcast %3 : vector<1x128xf32> to vector<8x128xf32>
    %5 = arith.addf %2, %4 : vector<8x128xf32>
    %c0_5 = arith.constant 0 : index
    %c0_6 = arith.constant 0 : index
    %6 = vector.load %arg4[%c0_5, %c0_6] : memref<8x128xf32, #tpu.memory_space<vmem>>, vector<8x128xf32>
    tpu.vector_store %arg4[%c0_5, %c0_6], %5 {strides = array<i32>} : memref<8x128xf32, #tpu.memory_space<vmem>>, vector<8x128xf32>,
    return
  }
  func.func @transform_0(%arg0: i32) -> (i32, i32) {
    %c0_i32 = arith.constant 0 : i32
    %c0_i32_0 = arith.constant 0 : i32
    return %arg0, %c0_i32 : i32, i32
  }
  func.func @transform_1(%arg0: i32) -> (i32, i32) {
    %c0_i32 = arith.constant 0 : i32
    %c0_i32_0 = arith.constant 0 : i32
    %c0_i32_1 = arith.constant 0 : i32
    return %c0_i32, %c0_i32_0 : i32, i32
  }
  func.func @transform_2(%arg0: i32) -> (i32, i32) {
    %c0_i32 = arith.constant 0 : i32
    %c0_i32_0 = arith.constant 0 : i32
    %c0_i32_1 = arith.constant 0 : i32
    return %c0_i32, %c0_i32_0 : i32, i32
  }
  func.func @transform_3(%arg0: i32) -> (i32, i32) {
    %c0_i32 = arith.constant 0 : i32
    %c0_i32_0 = arith.constant 0 : i32
    return %arg0, %c0_i32 : i32, i32
  }
}

</mosaic_0001>

<llo_original>
// kernel: tpu_custom_call.1
$region0: #{tpu_custom_call.1}
  #allocation0 [shape = 'u32[]', space=smem, size = 0x4, offset = 0x4, fixed_abs, tag = 'smem constant byte address 0x4 - core index']
  #allocation1 [shape = 'u32[144,128]{1,0:T(1,128)}', space=vmem, size = 0x12000, scoped, tag = 'internal scratch']
  %s0 = inlined_call_operand.hbm [shape: f32[8,256], index: 0, kind: input, shape index: {}]
  %s1 = inlined_call_operand.hbm [shape: f32[256,128], index: 1, kind: input, shape index: {}]
  %s2 = inlined_call_operand.vmem [shape: f32[1,128], index: 2, kind: input, shape index: {}]
  %s3 = inlined_call_operand.hbm [shape: f32[8,128], index: 3, kind: output, shape index: {}]
  %s4 = sld [smem:[#allocation0]]
  $region30: #{tpu_custom_call.1} parent=0
    _
  %s6 = ssub.s32 1, %s4
  %s7 = scalar_select 0, %s6, %s4
  $region1: #{tpu_custom_call.1} parent=0
    #allocation2 [shape = 'u8[8192]{0}', space=vmem, size = 0x2000, scoped, tag = 'input window, operand 0, single buffered']
    #allocation3 [shape = 's32[1]{0}', space=sflag, size = 0x4, scoped, tag = 'scoped memory for tpu_custom_call.1']
    #allocation4 [shape = 's32[1]{0}', space=sflag, size = 0x4, scoped, tag = 'scoped memory for tpu_custom_call.1']
    #allocation5 [shape = 'u8[131072]{0}', space=vmem, size = 0x20000, scoped, tag = 'input window, operand 1, single buffered']
    #allocation6 [shape = 's32[1]{0}', space=sflag, size = 0x4, scoped, tag = 'scoped memory for tpu_custom_call.1']
    #allocation7 [shape = 'u8[4096]{0}', space=vmem, size = 0x1000, scoped, tag = 'output window, operand 0, single buffered']
    %8 = vsyncpa [#allocation3], 0
    %9 = vsyncpa [#allocation6], 0
    %10 = vsyncpa [#allocation4], 0
    // Predicated region
    $region2: #{tpu_custom_call.1} parent=1 // pred_check
      _
    $region3: #{tpu_custom_call.1} parent=1 // pred_check_branch
      %12 = sbr.rel (0) target = $region5
    $region4: #{tpu_custom_call.1} parent=1 // pred_region
      %s14 = ssub.s32 256, 256
      %15 = vsyncadd [#allocation3], %s14
      %s17 = sshll.u32 [#allocation2], 4
      %s18 = int_to_ptr.vmem [resolvable:$true] %s17
      %20 = dma.hbm_to_vmem [thread:$0]  %s0, 256, %s18, [#allocation3]
    $region5: #{tpu_custom_call.1} parent=1 // pred_fallthru
      _
    // Predicated region
    $region6: #{tpu_custom_call.1} parent=1 // pred_check
      _
    $region7: #{tpu_custom_call.1} parent=1 // pred_check_branch
      %22 = sbr.rel (0) target = $region9
    $region8: #{tpu_custom_call.1} parent=1 // pred_region
      %s24 = ssub.s32 4096, 4096
      %25 = vsyncadd [#allocation6], %s24
      %s26 = sshll.u32 [#allocation5], 4
      %s27 = int_to_ptr.vmem [resolvable:$true] %s26
      %32 = dma.hbm_to_vmem [thread:$0]  %s1, 4096, %s27, [#allocation6], 128, 128, 8
    $region9: #{tpu_custom_call.1} parent=1 // pred_fallthru
      _
    // Predicated region
    $region10: #{tpu_custom_call.1} parent=1 // pred_check
      _
    $region11: #{tpu_custom_call.1} parent=1 // pred_check_branch
      %34 = sbr.rel (0) target = $region13
    $region12: #{tpu_custom_call.1} parent=1 // pred_region
      _
    $region13: #{tpu_custom_call.1} parent=1 // pred_fallthru
      _
    // Predicated region
    $region14: #{tpu_custom_call.1} parent=1 // pred_check
      _
    $region15: #{tpu_custom_call.1} parent=1 // pred_check_branch
      %36 = sbr.rel (0) target = $region17
    $region16: #{tpu_custom_call.1} parent=1 // pred_region
      %37 = dma.done [#allocation3], 256
    $region17: #{tpu_custom_call.1} parent=1 // pred_fallthru
      _
    // Predicated region
    $region18: #{tpu_custom_call.1} parent=1 // pred_check
      _
    $region19: #{tpu_custom_call.1} parent=1 // pred_check_branch
      %39 = sbr.rel (0) target = $region21
    $region20: #{tpu_custom_call.1} parent=1 // pred_region
      %40 = dma.done [#allocation6], 4096
    $region21: #{tpu_custom_call.1} parent=1 // pred_fallthru
      _
    %v41 = vld [vmem:[#allocation2] sm:$0xff]
    %v42 = vld [vmem:[#allocation2 + $0x8] sm:$0xff]
    %v43 = vld [vmem:[#allocation5] sm:$0xff]
    %v44 = vld [vmem:[#allocation5 + $0x8] sm:$0xff]
    %v45 = vld [vmem:[#allocation5 + $0x10] sm:$0xff]
    %v46 = vld [vmem:[#allocation5 + $0x18] sm:$0xff]
    %v47 = vld [vmem:[#allocation5 + $0x20] sm:$0xff]
    %v48 = vld [vmem:[#allocation5 + $0x28] sm:$0xff]
    %v49 = vld [vmem:[#allocation5 + $0x30] sm:$0xff]
    %v50 = vld [vmem:[#allocation5 + $0x38] sm:$0xff]
    %v51 = vld [vmem:[#allocation5 + $0x40] sm:$0xff]
    %v52 = vld [vmem:[#allocation5 + $0x48] sm:$0xff]
    %v53 = vld [vmem:[#allocation5 + $0x50] sm:$0xff]
    %v54 = vld [vmem:[#allocation5 + $0x58] sm:$0xff]
    %v55 = vld [vmem:[#allocation5 + $0x60] sm:$0xff]
    %v56 = vld [vmem:[#allocation5 + $0x68] sm:$0xff]
    %v57 = vld [vmem:[#allocation5 + $0x70] sm:$0xff]
    %v58 = vld [vmem:[#allocation5 + $0x78] sm:$0xff]
    %v59 = vld [vmem:[#allocation5 + $0x80] sm:$0xff]
    %v60 = vld [vmem:[#allocation5 + $0x88] sm:$0xff]
    %v61 = vld [vmem:[#allocation5 + $0x90] sm:$0xff]
    %v62 = vld [vmem:[#allocation5 + $0x98] sm:$0xff]
    %v63 = vld [vmem:[#allocation5 + $0xa0] sm:$0xff]
    %v64 = vld [vmem:[#allocation5 + $0xa8] sm:$0xff]
    %v65 = vld [vmem:[#allocation5 + $0xb0] sm:$0xff]
    %v66 = vld [vmem:[#allocation5 + $0xb8] sm:$0xff]
    %v67 = vld [vmem:[#allocation5 + $0xc0] sm:$0xff]
    %v68 = vld [vmem:[#allocation5 + $0xc8] sm:$0xff]
    %v69 = vld [vmem:[#allocation5 + $0xd0] sm:$0xff]
    %v70 = vld [vmem:[#allocation5 + $0xd8] sm:$0xff]
    %v71 = vld [vmem:[#allocation5 + $0xe0] sm:$0xff]
    %v72 = vld [vmem:[#allocation5 + $0xe8] sm:$0xff]
    %v73 = vld [vmem:[#allocation5 + $0xf0] sm:$0xff]
    %v74 = vld [vmem:[#allocation5 + $0xf8] sm:$0xff]
    %v75 = vld [vmem:[%s2] sm:$0x1]
    %v77 = vlaneseq
    %v78 = vshrl.u32 %v77, 7
    %v79 = vsub.s32 0, %v78
    %v80 = vrot.slane %v75, %v79
    %82 = vmatprep.subr.mxu0 0.0
    %83 = vmatpush1.msra.mxu0 %v58
    %84 = vmatprep.subr.mxu0 0.0
    %85 = vmatpush1.msra.mxu0 %v57
    %86 = vmatprep.subr.mxu0 0.0
    %87 = vmatpush1.msra.mxu0 %v56
    %88 = vmatprep.subr.mxu0 0.0
    %89 = vmatpush1.msra.mxu0 %v55
    %90 = vmatprep.subr.mxu0 0.0
    %91 = vmatpush1.msra.mxu0 %v54
    %92 = vmatprep.subr.mxu0 0.0
    %93 = vmatpush1.msra.mxu0 %v53
    %94 = vmatprep.subr.mxu0 0.0
    %95 = vmatpush1.msra.mxu0 %v52
    %96 = vmatprep.subr.mxu0 0.0
    %97 = vmatpush1.msra.mxu0 %v51
    %98 = vmatprep.subr.mxu0 0.0
    %99 = vmatpush1.msra.mxu0 %v50
    %100 = vmatprep.subr.mxu0 0.0
    %101 = vmatpush1.msra.mxu0 %v49
    %102 = vmatprep.subr.mxu0 0.0
    %103 = vmatpush1.msra.mxu0 %v48
    %104 = vmatprep.subr.mxu0 0.0
    %105 = vmatpush1.msra.mxu0 %v47
    %106 = vmatprep.subr.mxu0 0.0
    %107 = vmatpush1.msra.mxu0 %v46
    %108 = vmatprep.subr.mxu0 0.0
    %109 = vmatpush1.msra.mxu0 %v45
    %110 = vmatprep.subr.mxu0 0.0
    %111 = vmatpush1.msra.mxu0 %v44
    %112 = vmatprep.subr.mxu0 0.0
    %113 = vmatpush1.msra.mxu0 %v43
    %114 = vmatprep.subr.mxu0 0.0
    %115 = vmatpush2.msra.mxu0 %v74
    %116 = vmatprep.subr.mxu0 0.0
    %117 = vmatpush2.msra.mxu0 %v73
    %118 = vmatprep.subr.mxu0 0.0
    %119 = vmatpush2.msra.mxu0 %v72
    %120 = vmatprep.subr.mxu0 0.0
    %121 = vmatpush2.msra.mxu0 %v71
    %122 = vmatprep.subr.mxu0 0.0
    %123 = vmatpush2.msra.mxu0 %v70
    %124 = vmatprep.subr.mxu0 0.0
    %125 = vmatpush2.msra.mxu0 %v69
    %126 = vmatprep.subr.mxu0 0.0
    %127 = vmatpush2.msra.mxu0 %v68
    %128 = vmatprep.subr.mxu0 0.0
    %129 = vmatpush2.msra.mxu0 %v67
    %130 = vmatprep.subr.mxu0 0.0
    %131 = vmatpush2.msra.mxu0 %v66
    %132 = vmatprep.subr.mxu0 0.0
    %133 = vmatpush2.msra.mxu0 %v65
    %134 = vmatprep.subr.mxu0 0.0
    %135 = vmatpush2.msra.mxu0 %v64
    %136 = vmatprep.subr.mxu0 0.0
    %137 = vmatpush2.msra.mxu0 %v63
    %138 = vmatprep.subr.mxu0 0.0
    %139 = vmatpush2.msra.mxu0 %v62
    %140 = vmatprep.subr.mxu0 0.0
    %141 = vmatpush2.msra.mxu0 %v61
    %142 = vmatprep.subr.mxu0 0.0
    %143 = vmatpush2.msra.mxu0 %v60
    %144 = vmatprep.subr.mxu0 0.0
    %145 = vmatpush2.msra.mxu0 %v59
    %146 = vmatprep.mubr.f32.mxu0 %v42
    %147 = vmatmul.mubr.f32.gmra.mxu0 %v41
    %v148 = vpop.f32.mrf.mxu0
    %v149 = vadd.f32 %v80, %v148
    %v150 = vpop.f32.mrf.mxu0
    %151 = vdwg.mxu0
    %152 = vst [vmem:[#allocation7] sm:$0xff] %v149
    // Predicated region
    $region22: #{tpu_custom_call.1} parent=1 // pred_check
      _
    $region23: #{tpu_custom_call.1} parent=1 // pred_check_branch
      %154 = sbr.rel (0) target = $region25
    $region24: #{tpu_custom_call.1} parent=1 // pred_region
      %s156 = ssub.s32 128, 128
      %157 = vsyncadd [#allocation4], %s156
      %s159 = sshll.u32 [#allocation7], 4
      %s160 = int_to_ptr.vmem [resolvable:$true] %s159
      %162 = dma.vmem_to_hbm [thread:$0]  %s160, 128, %s3, [#allocation4]
    $region25: #{tpu_custom_call.1} parent=1 // pred_fallthru
      _
    // Predicated region
    $region26: #{tpu_custom_call.1} parent=1 // pred_check
      _
    $region27: #{tpu_custom_call.1} parent=1 // pred_check_branch
      %164 = sbr.rel (0) target = $region29
    $region28: #{tpu_custom_call.1} parent=1 // pred_region
      %165 = dma.done [#allocation4], 128
    $region29: #{tpu_custom_call.1} parent=1 // pred_fallthru
      _
    %166 = vsyncpa [#allocation3], 1
    %167 = vsyncpa [#allocation6], 1
    %168 = vsyncpa [#allocation4], 1

</llo_original>
